<compile_context>
chip_gen: v7x
topology: tpu7x:2x2x1
jax: 0.10.0
libtpu: 0.0.40
codegen_flags: <defaults>
</compile_context>

<pallas_src>
import jax
import jax.numpy as jnp
from jax.experimental import pallas as pl
from jax.experimental.pallas import tpu as pltpu


def lnp_kernel(x_ref, w_ref, b_ref, o_ref):
    # x_ref: (TB, D) VMEM  -- natural (batch, feature) block of the input
    # w_ref: (1, D)  VMEM  -- weight row, broadcast over the batch sublanes
    # b_ref: (1, 1)  SMEM  -- scalar bias
    # o_ref: (TB, 1) VMEM  -- per-row firing rate
    tb, d = x_ref.shape
    bias = b_ref[0, 0]

    # Chunk the feature axis so the f32 cast / product temporaries stay small
    # (~TB*min(512,D)*4 bytes live at a time) even when TB is large.
    chunk = 512
    acc = jnp.zeros((tb, 1), jnp.float32)
    for d0 in range(0, d, chunk):
        dc = min(chunk, d - d0)
        xc = x_ref[:, d0:d0 + dc].astype(jnp.float32)   # bf16-friendly per-chunk cast
        wc = w_ref[:, d0:d0 + dc].astype(jnp.float32)   # (1, dc)
        acc = acc + jnp.sum(xc * wc, axis=1, keepdims=True)  # VPU mul + XLU lane reduce

    o_ref[...] = jnp.exp(acc + bias).astype(o_ref.dtype)     # EUP


def _pick_batch_tile(B, D, itemsize):
    """VMEM-driven batch tile (rows per grid step).

    Targets ~2 MiB of x per block so per-grid-step overhead is amortised,
    keeps >= 2 tiles when the batch is big enough (v7x megacore), and keeps
    the double-buffered footprint under every generation's scoped-VMEM limit.
    """
    target_bytes = 2 * 1024 * 1024
    tb = (target_bytes // max(D * itemsize, 1)) // 128 * 128
    tb = max(tb, 128)
    b_sub = -(-B // 8) * 8                       # batch rounded up to a sublane multiple
    if b_sub >= 256:
        # Keep at least two balanced tiles so both v7x TensorCores get work.
        tb = min(tb, max(128, (b_sub // 2) // 128 * 128))
    tb = min(tb, b_sub)                          # never vastly exceed the batch
    return max(8, (tb // 8) * 8)                 # sublane (8) alignment


def lnp_forward(x, weight, bias):
    """LNP forward pass: exp(x @ weight.T + bias).

    x: (B, D), weight: (1, D), bias: (1,)  ->  firing_rate (B, 1) float32.
    """
    B, D = x.shape
    TB = _pick_batch_tile(B, D, x.dtype.itemsize)
    n_tiles = pl.cdiv(B, TB)   # ragged last tile handled by Pallas boundary masking

    w_row = weight.reshape(1, D)
    b2d = bias.reshape(1, 1).astype(jnp.float32)

    return pl.pallas_call(
        lnp_kernel,
        out_shape=jax.ShapeDtypeStruct((B, 1), jnp.float32),
        grid=(n_tiles,),
        in_specs=[
            pl.BlockSpec((TB, D), lambda i: (i, 0)),
            pl.BlockSpec((1, D), lambda i: (0, 0)),
            pl.BlockSpec((1, 1), lambda i: (0, 0), memory_space=pltpu.SMEM),
        ],
        out_specs=pl.BlockSpec((TB, 1), lambda i: (i, 0)),
        compiler_params=pltpu.CompilerParams(
            dimension_semantics=("parallel",),
            vmem_limit_bytes=32 * 1024 * 1024,
        ),
        cost_estimate=pl.CostEstimate(
            flops=2 * B * D,
            transcendentals=B,
            bytes_accessed=int(B * D * x.dtype.itemsize
                               + D * weight.dtype.itemsize
                               + B * 4 + 4),
        ),
    )(x, w_row, b2d)


if __name__ == "__main__":
    key = jax.random.PRNGKey(0)
    k_x, k_w, k_b = jax.random.split(key, 3)

    B, D = 8, 32  # batch, input_dim

    # Deterministic synthetic inputs/parameters (shapes from nn.Linear(input_dim, 1)).
    x = jax.random.normal(k_x, (B, D), dtype=jnp.float32)
    weight = jax.random.normal(k_w, (1, D), dtype=jnp.float32) * (1.0 / jnp.sqrt(D))
    bias = jax.random.normal(k_b, (1,), dtype=jnp.float32) * 0.1

    out = jax.block_until_ready(lnp_forward(x, weight, bias))

    # Reference check in plain JAX.
    ref = jnp.exp(x @ weight.T + bias[None, :])
    assert out.shape == (B, 1)
    assert jnp.allclose(out, ref, rtol=1e-5, atol=1e-5), "mismatch vs reference"

    print("KERNEL_OK")
</pallas_src>

<mosaic_0001>
module attributes {stable_mosaic.version = 11 : i64} {
  func.func @lnp_kernel(%arg0: i32, %arg1: memref<8x32xf32, #tpu.memory_space<vmem>>, %arg2: memref<1x32xf32, #tpu.memory_space<vmem>>, %arg3: memref<1x1xf32, #tpu.memory_space<smem>>, %arg4: memref<8x1xf32, #tpu.memory_space<vmem>>) attributes {dimension_semantics = [#tpu.dimension_semantics<parallel>], iteration_bounds = array<i64: 1>, scalar_prefetch = 0 : i64, scratch_operands = 0 : i64, tpu.core_type = #tpu.core_type<tc>, window_params = [{transform_indices = @transform_0, window_bounds = array<i64: 8, 32>}, {pipeline_mode = #tpu.pipeline_mode<synchronous>, transform_indices = @transform_1, window_bounds = array<i64: 1, 32>}, {transform_indices = @transform_2, window_bounds = array<i64: 1, 1>}, {transform_indices = @transform_3, window_bounds = array<i64: 8, 1>}]} {
    %c0 = arith.constant 0 : index
    %c0_0 = arith.constant 0 : index
    %0 = memref.load %arg3[%c0, %c0_0] : memref<1x1xf32, #tpu.memory_space<smem>>
    %cst = arith.constant 0.000000e+00 : f32
    %1 = vector.broadcast %cst : f32 to vector<8x1xf32>
    %c0_1 = arith.constant 0 : index
    %c0_2 = arith.constant 0 : index
    %2 = vector.load %arg1[%c0_1, %c0_2] : memref<8x32xf32, #tpu.memory_space<vmem>>, vector<8x32xf32>
    %c0_3 = arith.constant 0 : index
    %c0_4 = arith.constant 0 : index
    %3 = vector.load %arg2[%c0_3, %c0_4] : memref<1x32xf32, #tpu.memory_space<vmem>>, vector<1x32xf32>
    %4 = vector.broadcast %3 : vector<1x32xf32> to vector<8x32xf32>
    %5 = arith.mulf %2, %4 : vector<8x32xf32>
    %cst_5 = arith.constant dense<0.000000e+00> : vector<8xf32>
    %6 = vector.multi_reduction <add>, %5, %cst_5 [1] : vector<8x32xf32> to vector<8xf32>
    %7 = vector.shape_cast %6 : vector<8xf32> to vector<8x1xf32>
    %8 = arith.addf %1, %7 : vector<8x1xf32>
    %9 = vector.broadcast %0 : f32 to vector<8x1xf32>
    %10 = arith.addf %8, %9 : vector<8x1xf32>
    %11 = math.exp %10 : vector<8x1xf32>
    %c0_6 = arith.constant 0 : index
    %c0_7 = arith.constant 0 : index
    %12 = vector.load %arg4[%c0_6, %c0_7] : memref<8x1xf32, #tpu.memory_space<vmem>>, vector<8x1xf32>
    tpu.vector_store %arg4[%c0_6, %c0_7], %11 {strides = array<i32>} : memref<8x1xf32, #tpu.memory_space<vmem>>, vector<8x1xf32>,
    return
  }
  func.func @transform_0(%arg0: i32) -> (i32, i32) {
    %c0_i32 = arith.constant 0 : i32
    %c0_i32_0 = arith.constant 0 : i32
    return %arg0, %c0_i32 : i32, i32
  }
  func.func @transform_1(%arg0: i32) -> (i32, i32) {
    %c0_i32 = arith.constant 0 : i32
    %c0_i32_0 = arith.constant 0 : i32
    %c0_i32_1 = arith.constant 0 : i32
    return %c0_i32, %c0_i32_0 : i32, i32
  }
  func.func @transform_2(%arg0: i32) -> (i32, i32) {
    %c0_i32 = arith.constant 0 : i32
    %c0_i32_0 = arith.constant 0 : i32
    %c0_i32_1 = arith.constant 0 : i32
    return %c0_i32, %c0_i32_0 : i32, i32
  }
  func.func @transform_3(%arg0: i32) -> (i32, i32) {
    %c0_i32 = arith.constant 0 : i32
    %c0_i32_0 = arith.constant 0 : i32
    return %arg0, %c0_i32 : i32, i32
  }
}

</mosaic_0001>

<llo_original>
// kernel: tpu_custom_call.1
$region0: #{tpu_custom_call.1}
  #allocation0 [shape = 'u32[]', space=smem, size = 0x4, offset = 0x4, fixed_abs, tag = 'smem constant byte address 0x4 - core index']
  #allocation1 [shape = 'u32[144,128]{1,0:T(1,128)}', space=vmem, size = 0x12000, scoped, tag = 'internal scratch']
  #allocation2 [shape = 'f32[1,1]{1,0:T(1,128)S(6)}', space=smem, size = 0x200, scoped, tag = 'scoped memory for tpu_custom_call.1']
  %s0 = inlined_call_operand.hbm [shape: f32[8,32], index: 0, kind: input, shape index: {}]
  %s1 = inlined_call_operand.vmem [shape: f32[1,32], index: 1, kind: input, shape index: {}]
  %s2 = inlined_call_operand.<no memory space> [shape: f32[1,1], index: 2, kind: input, shape index: {}]
  %s3 = inlined_call_operand.vmem [shape: f32[8,1], index: 3, kind: output, shape index: {}]
  %s4 = sld [smem:[#allocation0]]
  $region26: #{tpu_custom_call.1} parent=0
    _
  %s6 = ssub.s32 1, %s4
  %s7 = scalar_select 0, %s6, %s4
  %8 = sst [smem:[#allocation2]] %s2
  $region1: #{tpu_custom_call.1} parent=0
    #allocation3 [shape = 'u8[4096]{0}', space=vmem, size = 0x1000, scoped, tag = 'input window, operand 0, single buffered']
    #allocation4 [shape = 's32[1]{0}', space=sflag, size = 0x4, scoped, tag = 'scoped memory for tpu_custom_call.1']
    %9 = vsyncpa [#allocation4], 0
    // Predicated region
    $region2: #{tpu_custom_call.1} parent=1 // pred_check
      _
    $region3: #{tpu_custom_call.1} parent=1 // pred_check_branch
      %11 = sbr.rel (0) target = $region5
    $region4: #{tpu_custom_call.1} parent=1 // pred_region
      %s13 = ssub.s32 128, 128
      %14 = vsyncadd [#allocation4], %s13
      %s16 = sshll.u32 [#allocation3], 4
      %s17 = int_to_ptr.vmem [resolvable:$true] %s16
      %19 = dma.hbm_to_vmem [thread:$0]  %s0, 128, %s17, [#allocation4]
    $region5: #{tpu_custom_call.1} parent=1 // pred_fallthru
      _
    // Predicated region
    $region6: #{tpu_custom_call.1} parent=1 // pred_check
      _
    $region7: #{tpu_custom_call.1} parent=1 // pred_check_branch
      %21 = sbr.rel (0) target = $region9
    $region8: #{tpu_custom_call.1} parent=1 // pred_region
      _
    $region9: #{tpu_custom_call.1} parent=1 // pred_fallthru
      _
    // Predicated region
    $region10: #{tpu_custom_call.1} parent=1 // pred_check
      _
    $region11: #{tpu_custom_call.1} parent=1 // pred_check_branch
      %23 = sbr.rel (0) target = $region13
    $region12: #{tpu_custom_call.1} parent=1 // pred_region
      _
    $region13: #{tpu_custom_call.1} parent=1 // pred_fallthru
      _
    // Predicated region
    $region14: #{tpu_custom_call.1} parent=1 // pred_check
      _
    $region15: #{tpu_custom_call.1} parent=1 // pred_check_branch
      %25 = sbr.rel (0) target = $region17
    $region16: #{tpu_custom_call.1} parent=1 // pred_region
      %26 = dma.done [#allocation4], 128
    $region17: #{tpu_custom_call.1} parent=1 // pred_fallthru
      _
    %s27 = sld [smem:[#allocation2]]
    %v28 = vld [vmem:[#allocation3] sm:$0xff]
    %v29 = vld [vmem:[%s1] sm:$0x1]
    %v31 = vlaneseq
    %v32 = vshrl.u32 %v31, 7
    %v33 = vsub.s32 0, %v32
    %v34 = vrot.slane %v29, %v33
    %v36 = vmul.f32 %v28, %v34
    %vm37 = vcmask 261120
    %v38 = vsel %vm37, %v36, 0.0
    %39 = vadd.xlane.f32.xlu0 %v38
    %v40 = vpop.xlane.xlu0 %39
    %v41 = vadd.f32 %v40, 0.0
    %v42 = vstv %s27
    %v43 = vadd.f32 %v41, %v42
    %v44 = vmul.f32 %v43, 1.442695
    %v45 = vpow.pop %v44
    %vm46 = vcmask 7168
    %47 = vst.msk [vmem:[%s3] sm:$0xff] %vm46, %v45
    // Predicated region
    $region18: #{tpu_custom_call.1} parent=1 // pred_check
      _
    $region19: #{tpu_custom_call.1} parent=1 // pred_check_branch
      %49 = sbr.rel (0) target = $region21
    $region20: #{tpu_custom_call.1} parent=1 // pred_region
      _
    $region21: #{tpu_custom_call.1} parent=1 // pred_fallthru
      _
    // Predicated region
    $region22: #{tpu_custom_call.1} parent=1 // pred_check
      _
    $region23: #{tpu_custom_call.1} parent=1 // pred_check_branch
      %51 = sbr.rel (0) target = $region25
    $region24: #{tpu_custom_call.1} parent=1 // pred_region
      _
    $region25: #{tpu_custom_call.1} parent=1 // pred_fallthru
      _
    %52 = vsyncpa [#allocation4], 1

</llo_original>
